<compile_context>
chip_gen: v7x
topology: tpu7x:2x2x1
jax: 0.10.0
libtpu: 0.0.40
codegen_flags: <defaults>
</compile_context>

<pallas_src>
import math

import jax
import jax.numpy as jnp
from jax.experimental import pallas as pl
from jax.experimental.pallas import tpu as pltpu

# ---- problem sizes ----------------------------------------------------------
N, CIN, H, W = 2, 3, 16, 16           # input (NCHW)
K = 3                                 # conv kernel
COUT = 253                            # in_d - 3
COUT_PAD = 256                        # channels padded to a 128-lane multiple
HO, WO = H - K + 1, W - K + 1         # valid conv output spatial dims (14, 14)
NP = N * HO * WO                      # 392 output pixels (rows of the im2col matrix)
KKC = K * K * CIN                     # 27 = matmul contraction depth
CNT = float(NP)                       # batch-norm population count per channel
EPS = 1e-5


# ---- fused kernel: one K=27 matmul + BN stats + (BN * 2) epilogue ------------
def fused_kernel(p_ref, w_ref, g_ref, be_ref, o_ref):
    # p_ref : (NP, KKC)        im2col patches (valid output pixels only, both images)
    # w_ref : (KKC, COUT_PAD)  flattened conv weights (zero-padded channels)
    # g_ref : (1, COUT_PAD)    BN gamma (zero-padded lanes -> padded out = 0)
    # be_ref: (1, COUT_PAD)    BN beta
    # o_ref : (NP, COUT_PAD)   final (BN(conv(x)) * 2) as a lane-dense 2-D slab

    # single MXU matmul: (392, 27) x (27, 256).  Conv bias is intentionally
    # omitted -- training-mode BN cancels a per-channel additive bias exactly.
    acc = jnp.dot(p_ref[...], w_ref[...], preferred_element_type=jnp.float32)

    # per-channel batch statistics over all 392 valid pixels (no mask needed)
    inv_cnt = 1.0 / CNT
    mean = jnp.sum(acc, axis=0, keepdims=True) * inv_cnt
    ex2 = jnp.sum(acc * acc, axis=0, keepdims=True) * inv_cnt
    var = ex2 - mean * mean                              # biased variance

    # fold gamma/beta and the (v1 + v1) doubling into one FMA
    inv = g_ref[...] * jax.lax.rsqrt(var + EPS)
    scale2 = inv + inv
    shift2 = 2.0 * (be_ref[...] - mean * inv)

    o_ref[...] = acc * scale2 + shift2


def fused_pallas(patches, w_flat, g2, be2):
    vmem = pl.BlockSpec(memory_space=pltpu.MemorySpace.VMEM)
    return pl.pallas_call(
        fused_kernel,
        out_shape=jax.ShapeDtypeStruct((NP, COUT_PAD), jnp.float32),
        in_specs=[vmem, vmem, vmem, vmem],
        out_specs=vmem,
    )(patches, w_flat, g2, be2)


def model_forward(x_nchw, w_oihw, bias, gamma, beta):
    """Full forward pass. x_nchw: (N, CIN, H, W) -> (N, COUT, HO, WO)."""
    del bias  # exactly cancelled by training-mode batch-norm (see kernel comment)

    # glue: NCHW -> NHWC plus the tiny (392, 27) im2col tile; XLA fuses this
    # into one small input fusion (~42 KB), replacing the old pad/stride trick.
    x_nhwc = jnp.transpose(x_nchw, (0, 2, 3, 1))                       # (N, H, W, CIN)
    patches = jnp.concatenate(
        [x_nhwc[:, kh:kh + HO, kw:kw + WO, :]
         for kh in range(K) for kw in range(K)], axis=-1)              # (N, HO, WO, 27)
    patches = patches.reshape(NP, KKC)                                 # (392, 27)

    # conv params: w_flat[kh*K*CIN + kw*CIN + ci, co] = w[co, ci, kh, kw]
    w_flat = jnp.transpose(w_oihw, (2, 3, 1, 0)).reshape(KKC, COUT)
    w_flat = jnp.pad(w_flat, ((0, 0), (0, COUT_PAD - COUT)))           # (27, 256)
    g2 = jnp.pad(gamma, (0, COUT_PAD - COUT)).reshape(1, COUT_PAD)     # zero-pad gamma
    be2 = jnp.pad(beta, (0, COUT_PAD - COUT)).reshape(1, COUT_PAD)

    out2d = fused_pallas(patches, w_flat, g2, be2)                     # (392, 256)

    # glue: crop channel padding and go back to NCHW in one fused XLA op
    out = out2d.reshape(N, HO, WO, COUT_PAD)[:, :, :, :COUT]
    return jnp.transpose(out, (0, 3, 1, 2))                            # (N, COUT, HO, WO)


def reference_forward(x_nchw, w_oihw, bias, gamma, beta):
    y = jax.lax.conv_general_dilated(
        x_nchw, w_oihw, window_strides=(1, 1), padding="VALID",
        dimension_numbers=("NCHW", "OIHW", "NCHW"))
    y = y + bias[None, :, None, None]
    m = y.mean(axis=(0, 2, 3))
    v = y.var(axis=(0, 2, 3))
    yn = (y - m[None, :, None, None]) * jax.lax.rsqrt(v + EPS)[None, :, None, None]
    yn = yn * gamma[None, :, None, None] + beta[None, :, None, None]
    return yn + yn


if __name__ == "__main__":
    key = jax.random.PRNGKey(0)
    kx, kw, kb = jax.random.split(key, 3)

    # deterministic parameter init (PyTorch-style uniform bound for Conv2d)
    fan_in = CIN * K * K
    bound = 1.0 / math.sqrt(fan_in)
    w_oihw = jax.random.uniform(kw, (COUT, CIN, K, K), jnp.float32, -bound, bound)
    bias = jax.random.uniform(kb, (COUT,), jnp.float32, -bound, bound)
    gamma = jnp.ones((COUT,), jnp.float32)   # BN default init
    beta = jnp.zeros((COUT,), jnp.float32)

    x = jax.random.normal(kx, (N, CIN, H, W), jnp.float32)

    fwd = jax.jit(model_forward)
    out = jax.block_until_ready(fwd(x, w_oihw, bias, gamma, beta))
    assert out.shape == (N, COUT, HO, WO), out.shape

    ref = jax.block_until_ready(reference_forward(x, w_oihw, bias, gamma, beta))
    assert jnp.allclose(out, ref, rtol=1e-3, atol=1e-3), float(
        jnp.max(jnp.abs(out - ref)))

    print("KERNEL_OK")
</pallas_src>

<mosaic_0001>
module attributes {stable_mosaic.version = 11 : i64} {
  func.func @fused_kernel(%arg0: memref<392x27xf32, #tpu.memory_space<vmem>>, %arg1: memref<27x256xf32, #tpu.memory_space<vmem>>, %arg2: memref<1x256xf32, #tpu.memory_space<vmem>>, %arg3: memref<1x256xf32, #tpu.memory_space<vmem>>, %arg4: memref<392x256xf32, #tpu.memory_space<vmem>>) attributes {dimension_semantics = [], scalar_prefetch = 0 : i64, scratch_operands = 0 : i64, tpu.core_type = #tpu.core_type<tc>} {
    %c0 = arith.constant 0 : index
    %c0_0 = arith.constant 0 : index
    %0 = vector.load %arg0[%c0, %c0_0] : memref<392x27xf32, #tpu.memory_space<vmem>>, vector<392x27xf32>
    %c0_1 = arith.constant 0 : index
    %c0_2 = arith.constant 0 : index
    %1 = vector.load %arg1[%c0_1, %c0_2] : memref<27x256xf32, #tpu.memory_space<vmem>>, vector<27x256xf32>
    %cst = arith.constant dense<0.000000e+00> : vector<392x256xf32>
    %2 = tpu.matmul %0, %1, %cst {dimension_numbers = #tpu.dot_dimension_numbers<[1], [0], [0], [1], [0, 0, 1, 1], [], []>} : vector<392x27xf32>, vector<27x256xf32>, vector<392x256xf32> -> vector<392x256xf32>
    %cst_3 = arith.constant dense<0.000000e+00> : vector<256xf32>
    %3 = vector.multi_reduction <add>, %2, %cst_3 [0] : vector<392x256xf32> to vector<256xf32>
    %4 = vector.shape_cast %3 : vector<256xf32> to vector<1x256xf32>
    %cst_4 = arith.constant 0.00255102036 : f32
    %5 = vector.broadcast %cst_4 : f32 to vector<1x256xf32>
    %6 = arith.mulf %4, %5 : vector<1x256xf32>
    %7 = arith.mulf %2, %2 : vector<392x256xf32>
    %cst_5 = arith.constant dense<0.000000e+00> : vector<256xf32>
    %8 = vector.multi_reduction <add>, %7, %cst_5 [0] : vector<392x256xf32> to vector<256xf32>
    %9 = vector.shape_cast %8 : vector<256xf32> to vector<1x256xf32>
    %cst_6 = arith.constant 0.00255102036 : f32
    %10 = vector.broadcast %cst_6 : f32 to vector<1x256xf32>
    %11 = arith.mulf %9, %10 : vector<1x256xf32>
    %12 = arith.mulf %6, %6 : vector<1x256xf32>
    %13 = arith.subf %11, %12 : vector<1x256xf32>
    %c0_7 = arith.constant 0 : index
    %c0_8 = arith.constant 0 : index
    %14 = vector.load %arg2[%c0_7, %c0_8] : memref<1x256xf32, #tpu.memory_space<vmem>>, vector<1x256xf32>
    %cst_9 = arith.constant 9.99999974E-6 : f32
    %15 = vector.broadcast %cst_9 : f32 to vector<1x256xf32>
    %16 = arith.addf %13, %15 : vector<1x256xf32>
    %17 = math.rsqrt %16 : vector<1x256xf32>
    %18 = arith.mulf %14, %17 : vector<1x256xf32>
    %19 = arith.addf %18, %18 : vector<1x256xf32>
    %c0_10 = arith.constant 0 : index
    %c0_11 = arith.constant 0 : index
    %20 = vector.load %arg3[%c0_10, %c0_11] : memref<1x256xf32, #tpu.memory_space<vmem>>, vector<1x256xf32>
    %21 = arith.mulf %6, %18 : vector<1x256xf32>
    %22 = arith.subf %20, %21 : vector<1x256xf32>
    %cst_12 = arith.constant 2.000000e+00 : f32
    %23 = vector.broadcast %cst_12 : f32 to vector<1x256xf32>
    %24 = arith.mulf %23, %22 : vector<1x256xf32>
    %25 = vector.broadcast %19 : vector<1x256xf32> to vector<392x256xf32>
    %26 = arith.mulf %2, %25 : vector<392x256xf32>
    %27 = vector.broadcast %24 : vector<1x256xf32> to vector<392x256xf32>
    %28 = arith.addf %26, %27 : vector<392x256xf32>
    %c0_13 = arith.constant 0 : index
    %c0_14 = arith.constant 0 : index
    %29 = vector.load %arg4[%c0_13, %c0_14] : memref<392x256xf32, #tpu.memory_space<vmem>>, vector<392x256xf32>
    tpu.vector_store %arg4[%c0_13, %c0_14], %28 {strides = array<i32>} : memref<392x256xf32, #tpu.memory_space<vmem>>, vector<392x256xf32>,
    return
  }
}

</mosaic_0001>

<llo_original>
// kernel: model_forward.1
$region0: #{model_forward.1}
  #allocation0 [shape = 'u32[]', space=smem, size = 0x4, offset = 0x4, fixed_abs, tag = 'smem constant byte address 0x4 - core index']
  #allocation1 [shape = 'u32[144,128]{1,0:T(1,128)}', space=vmem, size = 0x12000, scoped, tag = 'internal scratch']
  %s0 = inlined_call_operand.vmem [shape: f32[392,27], index: 0, kind: input, shape index: {}]
  %s1 = inlined_call_operand.vmem [shape: f32[27,256], index: 1, kind: input, shape index: {}]
  %s2 = inlined_call_operand.vmem [shape: f32[1,256], index: 2, kind: input, shape index: {}]
  %s3 = inlined_call_operand.vmem [shape: f32[1,256], index: 3, kind: input, shape index: {}]
  %s4 = inlined_call_operand.vmem [shape: f32[392,256], index: 4, kind: output, shape index: {}]
  %s5 = sld [smem:[#allocation0]]
  $region26: #{model_forward.1} parent=0
    _
  %s7 = ssub.s32 1, %s5
  %s8 = scalar_select 0, %s7, %s5
  // Predicated region
  $region2: #{model_forward.1} parent=0 // pred_check
    _
  $region3: #{model_forward.1} parent=0 // pred_check_branch
    %10 = sbr.rel (0) target = $region5
  $region4: #{model_forward.1} parent=0 // pred_region
    _
  $region5: #{model_forward.1} parent=0 // pred_fallthru
    _
  // Predicated region
  $region6: #{model_forward.1} parent=0 // pred_check
    _
  $region7: #{model_forward.1} parent=0 // pred_check_branch
    %12 = sbr.rel (0) target = $region9
  $region8: #{model_forward.1} parent=0 // pred_region
    _
  $region9: #{model_forward.1} parent=0 // pred_fallthru
    _
  // Predicated region
  $region10: #{model_forward.1} parent=0 // pred_check
    _
  $region11: #{model_forward.1} parent=0 // pred_check_branch
    %14 = sbr.rel (0) target = $region13
  $region12: #{model_forward.1} parent=0 // pred_region
    _
  $region13: #{model_forward.1} parent=0 // pred_fallthru
    _
  // Predicated region
  $region14: #{model_forward.1} parent=0 // pred_check
    _
  $region15: #{model_forward.1} parent=0 // pred_check_branch
    %16 = sbr.rel (0) target = $region17
  $region16: #{model_forward.1} parent=0 // pred_region
    _
  $region17: #{model_forward.1} parent=0 // pred_fallthru
    _
  %v17 = vld [vmem:[%s0] sm:$0xff]
  %v18 = vld [vmem:[%s0 + $0x8] sm:$0xff]
  %v19 = vld [vmem:[%s0 + $0x10] sm:$0xff]
  %v20 = vld [vmem:[%s0 + $0x18] sm:$0xff]
  %v21 = vld [vmem:[%s0 + $0x20] sm:$0xff]
  %v22 = vld [vmem:[%s0 + $0x28] sm:$0xff]
  %v23 = vld [vmem:[%s0 + $0x30] sm:$0xff]
  %v24 = vld [vmem:[%s0 + $0x38] sm:$0xff]
  %v25 = vld [vmem:[%s0 + $0x40] sm:$0xff]
  %v26 = vld [vmem:[%s0 + $0x48] sm:$0xff]
  %v27 = vld [vmem:[%s0 + $0x50] sm:$0xff]
  %v28 = vld [vmem:[%s0 + $0x58] sm:$0xff]
  %v29 = vld [vmem:[%s0 + $0x60] sm:$0xff]
  %v30 = vld [vmem:[%s0 + $0x68] sm:$0xff]
  %v31 = vld [vmem:[%s0 + $0x70] sm:$0xff]
  %v32 = vld [vmem:[%s0 + $0x78] sm:$0xff]
  %v33 = vld [vmem:[%s0 + $0x80] sm:$0xff]
  %v34 = vld [vmem:[%s0 + $0x88] sm:$0xff]
  %v35 = vld [vmem:[%s0 + $0x90] sm:$0xff]
  %v36 = vld [vmem:[%s0 + $0x98] sm:$0xff]
  %v37 = vld [vmem:[%s0 + $0xa0] sm:$0xff]
  %v38 = vld [vmem:[%s0 + $0xa8] sm:$0xff]
  %v39 = vld [vmem:[%s0 + $0xb0] sm:$0xff]
  %v40 = vld [vmem:[%s0 + $0xb8] sm:$0xff]
  %v41 = vld [vmem:[%s0 + $0xc0] sm:$0xff]
  %v42 = vld [vmem:[%s0 + $0xc8] sm:$0xff]
  %v43 = vld [vmem:[%s0 + $0xd0] sm:$0xff]
  %v44 = vld [vmem:[%s0 + $0xd8] sm:$0xff]
  %v45 = vld [vmem:[%s0 + $0xe0] sm:$0xff]
  %v46 = vld [vmem:[%s0 + $0xe8] sm:$0xff]
  %v47 = vld [vmem:[%s0 + $0xf0] sm:$0xff]
  %v48 = vld [vmem:[%s0 + $0xf8] sm:$0xff]
  %v49 = vld [vmem:[%s0 + $0x100] sm:$0xff]
  %v50 = vld [vmem:[%s0 + $0x108] sm:$0xff]
  %v51 = vld [vmem:[%s0 + $0x110] sm:$0xff]
  %v52 = vld [vmem:[%s0 + $0x118] sm:$0xff]
  %v53 = vld [vmem:[%s0 + $0x120] sm:$0xff]
  %v54 = vld [vmem:[%s0 + $0x128] sm:$0xff]
  %v55 = vld [vmem:[%s0 + $0x130] sm:$0xff]
  %v56 = vld [vmem:[%s0 + $0x138] sm:$0xff]
  %v57 = vld [vmem:[%s0 + $0x140] sm:$0xff]
  %v58 = vld [vmem:[%s0 + $0x148] sm:$0xff]
  %v59 = vld [vmem:[%s0 + $0x150] sm:$0xff]
  %v60 = vld [vmem:[%s0 + $0x158] sm:$0xff]
  %v61 = vld [vmem:[%s0 + $0x160] sm:$0xff]
  %v62 = vld [vmem:[%s0 + $0x168] sm:$0xff]
  %v63 = vld [vmem:[%s0 + $0x170] sm:$0xff]
  %v64 = vld [vmem:[%s0 + $0x178] sm:$0xff]
  %v65 = vld [vmem:[%s0 + $0x180] sm:$0xff]
  %v66 = vld [vmem:[%s1] sm:$0xff]
  %v67 = vld [vmem:[%s1 + $0x8] sm:$0xff]
  %v68 = vld [vmem:[%s1 + $0x10] sm:$0xff]
  %v69 = vld [vmem:[%s1 + $0x18] sm:$0xff]
  %v70 = vld [vmem:[%s1 + $0x20] sm:$0xff]
  %v71 = vld [vmem:[%s1 + $0x28] sm:$0xff]
  %v72 = vld [vmem:[%s1 + $0x30] sm:$0x7]
  %v73 = vld [vmem:[%s1 + $0x38] sm:$0x7]
  %vm74 = vcmask 220160
  %v76 = vsel %vm74, %v17, 0
  %v79 = vsel %vm74, %v18, 0
  %v82 = vsel %vm74, %v19, 0
  %v85 = vsel %vm74, %v20, 0
  %v88 = vsel %vm74, %v21, 0
  %v91 = vsel %vm74, %v22, 0
  %v94 = vsel %vm74, %v23, 0
  %v97 = vsel %vm74, %v24, 0
  %v100 = vsel %vm74, %v25, 0
  %v103 = vsel %vm74, %v26, 0
  %v106 = vsel %vm74, %v27, 0
  %v109 = vsel %vm74, %v28, 0
  %v112 = vsel %vm74, %v29, 0
  %v115 = vsel %vm74, %v30, 0
  %v118 = vsel %vm74, %v31, 0
  %v121 = vsel %vm74, %v32, 0
  %v124 = vsel %vm74, %v33, 0
  %v127 = vsel %vm74, %v34, 0
  %v130 = vsel %vm74, %v35, 0
  %v133 = vsel %vm74, %v36, 0
  %v136 = vsel %vm74, %v37, 0
  %v139 = vsel %vm74, %v38, 0
  %v142 = vsel %vm74, %v39, 0
  %v145 = vsel %vm74, %v40, 0
  %v148 = vsel %vm74, %v41, 0
  %v151 = vsel %vm74, %v42, 0
  %v154 = vsel %vm74, %v43, 0
  %v157 = vsel %vm74, %v44, 0
  %v160 = vsel %vm74, %v45, 0
  %v163 = vsel %vm74, %v46, 0
  %v166 = vsel %vm74, %v47, 0
  %v169 = vsel %vm74, %v48, 0
  %v172 = vsel %vm74, %v49, 0
  %v175 = vsel %vm74, %v50, 0
  %v178 = vsel %vm74, %v51, 0
  %v181 = vsel %vm74, %v52, 0
  %v184 = vsel %vm74, %v53, 0
  %v187 = vsel %vm74, %v54, 0
  %v190 = vsel %vm74, %v55, 0
  %v193 = vsel %vm74, %v56, 0
  %v196 = vsel %vm74, %v57, 0
  %v199 = vsel %vm74, %v58, 0
  %v202 = vsel %vm74, %v59, 0
  %v205 = vsel %vm74, %v60, 0
  %v208 = vsel %vm74, %v61, 0
  %v211 = vsel %vm74, %v62, 0
  %v214 = vsel %vm74, %v63, 0
  %v217 = vsel %vm74, %v64, 0
  %v220 = vsel %vm74, %v65, 0
  %vm222 = vcmask 1042432
  %v224 = vsel %vm222, %v72, 0
  %v227 = vsel %vm222, %v73, 0
  %229 = vmatprep.subr.mxu0 %v67
  %230 = vmatpush1.msra.mxu0 %v66
  %231 = vmatprep.subr.mxu0 %v69
  %232 = vmatpush1.msra.mxu0 %v68
  %233 = vmatprep.subr.mxu0 %v71
  %234 = vmatpush1.msra.mxu0 %v70
  %235 = vmatprep.subr.mxu0 %v227
  %236 = vmatpush1.msra.mxu0 %v224
  %237 = vmatprep.subr.mxu0 0.0
  %238 = vmatpush1.msra.mxu0 0.0
  %239 = vmatprep.subr.mxu0 0.0
  %240 = vmatpush1.msra.mxu0 0.0
  %241 = vmatprep.subr.mxu0 0.0
  %242 = vmatpush1.msra.mxu0 0.0
  %243 = vmatprep.subr.mxu0 0.0
  %244 = vmatpush1.msra.mxu0 0.0
  %245 = vmatprep.subr.mxu0 0.0
  %246 = vmatpush1.msra.mxu0 0.0
  %247 = vmatprep.subr.mxu0 0.0
  %248 = vmatpush1.msra.mxu0 0.0
  %249 = vmatprep.subr.mxu0 0.0
  %250 = vmatpush1.msra.mxu0 0.0
  %251 = vmatprep.subr.mxu0 0.0
  %252 = vmatpush1.msra.mxu0 0.0
  %253 = vmatprep.subr.mxu0 0.0
  %254 = vmatpush1.msra.mxu0 0.0
  %255 = vmatprep.subr.mxu0 0.0
  %256 = vmatpush1.msra.mxu0 0.0
  %257 = vmatprep.subr.mxu0 0.0
  %258 = vmatpush1.msra.mxu0 0.0
  %259 = vmatprep.subr.mxu0 0.0
  %260 = vmatpush1.msra.mxu0 0.0
  %261 = vmatprep.subr.mxu0 0.0
  %262 = vmatpush1.msra.mxu0 0.0
  %263 = vmatprep.subr.mxu0 0.0
  %264 = vmatpush1.msra.mxu0 0.0
  %265 = vmatprep.subr.mxu0 0.0
  %266 = vmatpush1.msra.mxu0 0.0
  %267 = vmatprep.subr.mxu0 0.0
  %268 = vmatpush1.msra.mxu0 0.0
  %269 = vmatprep.subr.mxu0 0.0
  %270 = vmatpush1.msra.mxu0 0.0
  %271 = vmatprep.subr.mxu0 0.0
  %272 = vmatpush1.msra.mxu0 0.0
  %273 = vmatprep.subr.mxu0 0.0
  %274 = vmatpush1.msra.mxu0 0.0
  %275 = vmatprep.subr.mxu0 0.0
  %276 = vmatpush1.msra.mxu0 0.0
  %277 = vmatprep.subr.mxu0 0.0
  %278 = vmatpush1.msra.mxu0 0.0
  %279 = vmatprep.subr.mxu0 0.0
  %280 = vmatpush1.msra.mxu0 0.0
  %281 = vmatprep.subr.mxu0 0.0
  %282 = vmatpush1.msra.mxu0 0.0
  %283 = vmatprep.subr.mxu0 0.0
  %284 = vmatpush1.msra.mxu0 0.0
  %285 = vmatprep.subr.mxu0 0.0
  %286 = vmatpush1.msra.mxu0 0.0
  %287 = vmatprep.subr.mxu0 0.0
  %288 = vmatpush1.msra.mxu0 0.0
  %289 = vmatprep.subr.mxu0 0.0
  %290 = vmatpush1.msra.mxu0 0.0
  %291 = vmatprep.subr.mxu0 0.0
  %292 = vmatpush1.msra.mxu0 0.0
  %293 = vmatprep.mubr.f32.mxu0 0.0
  %294 = vmatmul.mubr.f32.gmra.mrb[0].mxu0 %v76
  %v295 = vpop.f32.mrb[0].mxu0
  %v296 = vadd.f32 0.0, %v295
  %v297 = vpop.f32.mrb[0].mxu0
  %v298 = vadd.f32 0.0, %v297
  %299 = vmatprep.mubr.f32.mxu0 0.0
  %300 = vmatmul.mubr.f32.gmra.mrb[0].mxu0 %v79
  %v301 = vpop.f32.mrb[0].mxu0
  %v302 = vadd.f32 0.0, %v301
  %v303 = vpop.f32.mrb[0].mxu0
  %v304 = vadd.f32 0.0, %v303
  %305 = vmatprep.mubr.f32.mxu0 0.0
  %306 = vmatmul.mubr.f32.gmra.mrb[0].mxu0 %v82
  %v307 = vpop.f32.mrb[0].mxu0
  %v308 = vadd.f32 0.0, %v307
  %v309 = vpop.f32.mrb[0].mxu0
  %v310 = vadd.f32 0.0, %v309
  %311 = vmatprep.mubr.f32.mxu0 0.0
  %312 = vmatmul.mubr.f32.gmra.mrb[0].mxu0 %v85
  %v313 = vpop.f32.mrb[0].mxu0
  %v314 = vadd.f32 0.0, %v313
  %v315 = vpop.f32.mrb[0].mxu0
  %v316 = vadd.f32 0.0, %v315
  %317 = vmatprep.mubr.f32.mxu0 0.0
  %318 = vmatmul.mubr.f32.gmra.mrb[0].mxu0 %v88
  %v319 = vpop.f32.mrb[0].mxu0
  %v320 = vadd.f32 0.0, %v319
  %v321 = vpop.f32.mrb[0].mxu0
  %v322 = vadd.f32 0.0, %v321
  %323 = vmatprep.mubr.f32.mxu0 0.0
  %324 = vmatmul.mubr.f32.gmra.mrb[0].mxu0 %v91
  %v325 = vpop.f32.mrb[0].mxu0
  %v326 = vadd.f32 0.0, %v325
  %v327 = vpop.f32.mrb[0].mxu0
  %v328 = vadd.f32 0.0, %v327
  %329 = vmatprep.mubr.f32.mxu0 0.0
  %330 = vmatmul.mubr.f32.gmra.mrb[0].mxu0 %v94
  %v331 = vpop.f32.mrb[0].mxu0
  %v332 = vadd.f32 0.0, %v331
  %v333 = vpop.f32.mrb[0].mxu0
  %v334 = vadd.f32 0.0, %v333
  %335 = vmatprep.mubr.f32.mxu0 0.0
  %336 = vmatmul.mubr.f32.gmra.mrb[0].mxu0 %v97
  %v337 = vpop.f32.mrb[0].mxu0
  %v338 = vadd.f32 0.0, %v337
  %v339 = vpop.f32.mrb[0].mxu0
  %v340 = vadd.f32 0.0, %v339
  %341 = vmatprep.mubr.f32.mxu0 0.0
  %342 = vmatmul.mubr.f32.gmra.mrb[0].mxu0 %v100
  %v343 = vpop.f32.mrb[0].mxu0
  %v344 = vadd.f32 0.0, %v343
  %v345 = vpop.f32.mrb[0].mxu0
  %v346 = vadd.f32 0.0, %v345
  %347 = vmatprep.mubr.f32.mxu0 0.0
  %348 = vmatmul.mubr.f32.gmra.mrb[0].mxu0 %v103
  %v349 = vpop.f32.mrb[0].mxu0
  %v350 = vadd.f32 0.0, %v349
  %v351 = vpop.f32.mrb[0].mxu0
  %v352 = vadd.f32 0.0, %v351
  %353 = vmatprep.mubr.f32.mxu0 0.0
  %354 = vmatmul.mubr.f32.gmra.mrb[0].mxu0 %v106
  %v355 = vpop.f32.mrb[0].mxu0
  %v356 = vadd.f32 0.0, %v355
  %v357 = vpop.f32.mrb[0].mxu0
  %v358 = vadd.f32 0.0, %v357
  %359 = vmatprep.mubr.f32.mxu0 0.0
  %360 = vmatmul.mubr.f32.gmra.mrb[0].mxu0 %v109
  %v361 = vpop.f32.mrb[0].mxu0
  %v362 = vadd.f32 0.0, %v361
  %v363 = vpop.f32.mrb[0].mxu0
  %v364 = vadd.f32 0.0, %v363
  %365 = vmatprep.mubr.f32.mxu0 0.0
  %366 = vmatmul.mubr.f32.gmra.mrb[0].mxu0 %v112
  %v367 = vpop.f32.mrb[0].mxu0
  %v368 = vadd.f32 0.0, %v367
  %v369 = vpop.f32.mrb[0].mxu0
  %v370 = vadd.f32 0.0, %v369
  %371 = vmatprep.mubr.f32.mxu0 0.0
  %372 = vmatmul.mubr.f32.gmra.mrb[0].mxu0 %v115
  %v373 = vpop.f32.mrb[0].mxu0
  %v374 = vadd.f32 0.0, %v373
  %v375 = vpop.f32.mrb[0].mxu0
  %v376 = vadd.f32 0.0, %v375
  %377 = vmatprep.mubr.f32.mxu0 0.0
  %378 = vmatmul.mubr.f32.gmra.mrb[0].mxu0 %v118
  %v379 = vpop.f32.mrb[0].mxu0
  %v380 = vadd.f32 0.0, %v379
  %v381 = vpop.f32.mrb[0].mxu0
  %v382 = vadd.f32 0.0, %v381
  %383 = vmatprep.mubr.f32.mxu0 0.0
  %384 = vmatmul.mubr.f32.gmra.mrb[0].mxu0 %v121
  %v385 = vpop.f32.mrb[0].mxu0
  %v386 = vadd.f32 0.0, %v385
  %v387 = vpop.f32.mrb[0].mxu0
  %v388 = vadd.f32 0.0, %v387
  %389 = vmatprep.mubr.f32.mxu0 0.0
  %390 = vmatmul.mubr.f32.gmra.mrb[0].mxu0 %v124
  %v391 = vpop.f32.mrb[0].mxu0
  %v392 = vadd.f32 0.0, %v391
  %v393 = vpop.f32.mrb[0].mxu0
  %v394 = vadd.f32 0.0, %v393
  %395 = vmatprep.mubr.f32.mxu0 0.0
  %396 = vmatmul.mubr.f32.gmra.mrb[0].mxu0 %v127
  %v397 = vpop.f32.mrb[0].mxu0
  %v398 = vadd.f32 0.0, %v397
  %v399 = vpop.f32.mrb[0].mxu0
  %v400 = vadd.f32 0.0, %v399
  %401 = vmatprep.mubr.f32.mxu0 0.0
  %402 = vmatmul.mubr.f32.gmra.mrb[0].mxu0 %v130
  %v403 = vpop.f32.mrb[0].mxu0
  %v404 = vadd.f32 0.0, %v403
  %v405 = vpop.f32.mrb[0].mxu0
  %v406 = vadd.f32 0.0, %v405
  %407 = vmatprep.mubr.f32.mxu0 0.0
  %408 = vmatmul.mubr.f32.gmra.mrb[0].mxu0 %v133
  %v409 = vpop.f32.mrb[0].mxu0
  %v410 = vadd.f32 0.0, %v409
  %v411 = vpop.f32.mrb[0].mxu0
  %v412 = vadd.f32 0.0, %v411
  %413 = vmatprep.mubr.f32.mxu0 0.0
  %414 = vmatmul.mubr.f32.gmra.mrb[0].mxu0 %v136
  %v415 = vpop.f32.mrb[0].mxu0
  %v416 = vadd.f32 0.0, %v415
  %v417 = vpop.f32.mrb[0].mxu0
  %v418 = vadd.f32 0.0, %v417
  %419 = vmatprep.mubr.f32.mxu0 0.0
  %420 = vmatmul.mubr.f32.gmra.mrb[0].mxu0 %v139
  %v421 = vpop.f32.mrb[0].mxu0
  %v422 = vadd.f32 0.0, %v421
  %v423 = vpop.f32.mrb[0].mxu0
  %v424 = vadd.f32 0.0, %v423
  %425 = vmatprep.mubr.f32.mxu0 0.0
  %426 = vmatmul.mubr.f32.gmra.mrb[0].mxu0 %v142
  %v427 = vpop.f32.mrb[0].mxu0
  %v428 = vadd.f32 0.0, %v427
  %v429 = vpop.f32.mrb[0].mxu0
  %v430 = vadd.f32 0.0, %v429
  %431 = vmatprep.mubr.f32.mxu0 0.0
  %432 = vmatmul.mubr.f32.gmra.mrb[0].mxu0 %v145
  %v433 = vpop.f32.mrb[0].mxu0
  %v434 = vadd.f32 0.0, %v433
  %v435 = vpop.f32.mrb[0].mxu0
  %v436 = vadd.f32 0.0, %v435
  %437 = vmatprep.mubr.f32.mxu0 0.0
  %438 = vmatmul.mubr.f32.gmra.mrb[0].mxu0 %v148
  %v439 = vpop.f32.mrb[0].mxu0
  %v440 = vadd.f32 0.0, %v439
  %v441 = vpop.f32.mrb[0].mxu0
  %v442 = vadd.f32 0.0, %v441
  %443 = vmatprep.mubr.f32.mxu0 0.0
  %444 = vmatmul.mubr.f32.gmra.mrb[0].mxu0 %v151
  %v445 = vpop.f32.mrb[0].mxu0
  %v446 = vadd.f32 0.0, %v445
  %v447 = vpop.f32.mrb[0].mxu0
  %v448 = vadd.f32 0.0, %v447
  %449 = vmatprep.mubr.f32.mxu0 0.0
  %450 = vmatmul.mubr.f32.gmra.mrb[0].mxu0 %v154
  %v451 = vpop.f32.mrb[0].mxu0
  %v452 = vadd.f32 0.0, %v451
  %v453 = vpop.f32.mrb[0].mxu0
  %v454 = vadd.f32 0.0, %v453
  %455 = vmatprep.mubr.f32.mxu0 0.0
  %456 = vmatmul.mubr.f32.gmra.mrb[0].mxu0 %v157
  %v457 = vpop.f32.mrb[0].mxu0
  %v458 = vadd.f32 0.0, %v457
  %v459 = vpop.f32.mrb[0].mxu0
  %v460 = vadd.f32 0.0, %v459
  %461 = vmatprep.mubr.f32.mxu0 0.0
  %462 = vmatmul.mubr.f32.gmra.mrb[0].mxu0 %v160
  %v463 = vpop.f32.mrb[0].mxu0
  %v464 = vadd.f32 0.0, %v463
  %v465 = vpop.f32.mrb[0].mxu0
  %v466 = vadd.f32 0.0, %v465
  %467 = vmatprep.mubr.f32.mxu0 0.0
  %468 = vmatmul.mubr.f32.gmra.mrb[0].mxu0 %v163
  %v469 = vpop.f32.mrb[0].mxu0
  %v470 = vadd.f32 0.0, %v469
  %v471 = vpop.f32.mrb[0].mxu0
  %v472 = vadd.f32 0.0, %v471
  %473 = vmatprep.mubr.f32.mxu0 0.0
  %474 = vmatmul.mubr.f32.gmra.mrb[0].mxu0 %v166
  %v475 = vpop.f32.mrb[0].mxu0
  %v476 = vadd.f32 0.0, %v475
  %v477 = vpop.f32.mrb[0].mxu0
  %v478 = vadd.f32 0.0, %v477
  %479 = vmatprep.mubr.f32.mxu0 0.0
  %480 = vmatmul.mubr.f32.gmra.mrb[0].mxu0 %v169
  %v481 = vpop.f32.mrb[0].mxu0
  %v482 = vadd.f32 0.0, %v481
  %v483 = vpop.f32.mrb[0].mxu0
  %v484 = vadd.f32 0.0, %v483
  %485 = vmatprep.mubr.f32.mxu0 0.0
  %486 = vmatmul.mubr.f32.gmra.mrb[0].mxu0 %v172
  %v487 = vpop.f32.mrb[0].mxu0
  %v488 = vadd.f32 0.0, %v487
  %v489 = vpop.f32.mrb[0].mxu0
  %v490 = vadd.f32 0.0, %v489
  %491 = vmatprep.mubr.f32.mxu0 0.0
  %492 = vmatmul.mubr.f32.gmra.mrb[0].mxu0 %v175
  %v493 = vpop.f32.mrb[0].mxu0
  %v494 = vadd.f32 0.0, %v493
  %v495 = vpop.f32.mrb[0].mxu0
  %v496 = vadd.f32 0.0, %v495
  %497 = vmatprep.mubr.f32.mxu0 0.0
  %498 = vmatmul.mubr.f32.gmra.mrb[0].mxu0 %v178
  %v499 = vpop.f32.mrb[0].mxu0
  %v500 = vadd.f32 0.0, %v499
  %v501 = vpop.f32.mrb[0].mxu0
  %v502 = vadd.f32 0.0, %v501
  %503 = vmatprep.mubr.f32.mxu0 0.0
  %504 = vmatmul.mubr.f32.gmra.mrb[0].mxu0 %v181
  %v505 = vpop.f32.mrb[0].mxu0
  %v506 = vadd.f32 0.0, %v505
  %v507 = vpop.f32.mrb[0].mxu0
  %v508 = vadd.f32 0.0, %v507
  %509 = vmatprep.mubr.f32.mxu0 0.0
  %510 = vmatmul.mubr.f32.gmra.mrb[0].mxu0 %v184
  %v511 = vpop.f32.mrb[0].mxu0
  %v512 = vadd.f32 0.0, %v511
  %v513 = vpop.f32.mrb[0].mxu0
  %v514 = vadd.f32 0.0, %v513
  %515 = vmatprep.mubr.f32.mxu0 0.0
  %516 = vmatmul.mubr.f32.gmra.mrb[0].mxu0 %v187
  %v517 = vpop.f32.mrb[0].mxu0
  %v518 = vadd.f32 0.0, %v517
  %v519 = vpop.f32.mrb[0].mxu0
  %v520 = vadd.f32 0.0, %v519
  %521 = vmatprep.mubr.f32.mxu0 0.0
  %522 = vmatmul.mubr.f32.gmra.mrb[0].mxu0 %v190
  %v523 = vpop.f32.mrb[0].mxu0
  %v524 = vadd.f32 0.0, %v523
  %v525 = vpop.f32.mrb[0].mxu0
  %v526 = vadd.f32 0.0, %v525
  %527 = vmatprep.mubr.f32.mxu0 0.0
  %528 = vmatmul.mubr.f32.gmra.mrb[0].mxu0 %v193
  %v529 = vpop.f32.mrb[0].mxu0
  %v530 = vadd.f32 0.0, %v529
  %v531 = vpop.f32.mrb[0].mxu0
  %v532 = vadd.f32 0.0, %v531
  %533 = vmatprep.mubr.f32.mxu0 0.0
  %534 = vmatmul.mubr.f32.gmra.mrb[0].mxu0 %v196
  %v535 = vpop.f32.mrb[0].mxu0
  %v536 = vadd.f32 0.0, %v535
  %v537 = vpop.f32.mrb[0].mxu0
  %v538 = vadd.f32 0.0, %v537
  %539 = vmatprep.mubr.f32.mxu0 0.0
  %540 = vmatmul.mubr.f32.gmra.mrb[0].mxu0 %v199
  %v541 = vpop.f32.mrb[0].mxu0
  %v542 = vadd.f32 0.0, %v541
  %v543 = vpop.f32.mrb[0].mxu0
  %v544 = vadd.f32 0.0, %v543
  %545 = vmatprep.mubr.f32.mxu0 0.0
  %546 = vmatmul.mubr.f32.gmra.mrb[0].mxu0 %v202
  %v547 = vpop.f32.mrb[0].mxu0
  %v548 = vadd.f32 0.0, %v547
  %v549 = vpop.f32.mrb[0].mxu0
  %v550 = vadd.f32 0.0, %v549
  %551 = vmatprep.mubr.f32.mxu0 0.0
  %552 = vmatmul.mubr.f32.gmra.mrb[0].mxu0 %v205
  %v553 = vpop.f32.mrb[0].mxu0
  %v554 = vadd.f32 0.0, %v553
  %v555 = vpop.f32.mrb[0].mxu0
  %v556 = vadd.f32 0.0, %v555
  %557 = vmatprep.mubr.f32.mxu0 0.0
  %558 = vmatmul.mubr.f32.gmra.mrb[0].mxu0 %v208
  %v559 = vpop.f32.mrb[0].mxu0
  %v560 = vadd.f32 0.0, %v559
  %v561 = vpop.f32.mrb[0].mxu0
  %v562 = vadd.f32 0.0, %v561
  %563 = vmatprep.mubr.f32.mxu0 0.0
  %564 = vmatmul.mubr.f32.gmra.mrb[0].mxu0 %v211
  %v565 = vpop.f32.mrb[0].mxu0
  %v566 = vadd.f32 0.0, %v565
  %v567 = vpop.f32.mrb[0].mxu0
  %v568 = vadd.f32 0.0, %v567
  %569 = vmatprep.mubr.f32.mxu0 0.0
  %570 = vmatmul.mubr.f32.gmra.mrb[0].mxu0 %v214
  %v571 = vpop.f32.mrb[0].mxu0
  %v572 = vadd.f32 0.0, %v571
  %v573 = vpop.f32.mrb[0].mxu0
  %v574 = vadd.f32 0.0, %v573
  %575 = vmatprep.mubr.f32.mxu0 0.0
  %576 = vmatmul.mubr.f32.gmra.mrb[0].mxu0 %v217
  %v577 = vpop.f32.mrb[0].mxu0
  %v578 = vadd.f32 0.0, %v577
  %v579 = vpop.f32.mrb[0].mxu0
  %v580 = vadd.f32 0.0, %v579
  %581 = vmatprep.mubr.f32.mxu0 0.0
  %582 = vmatmul.mubr.f32.gmra.mrb[0].mxu0 %v220
  %v583 = vpop.f32.mrb[0].mxu0
  %v584 = vadd.f32 0.0, %v583
  %v585 = vpop.f32.mrb[0].mxu0
  %v586 = vadd.f32 0.0, %v585
  %587 = vdwg.mxu0
  %v588 = vadd.f32 %v296, %v302
  %v589 = vadd.f32 %v588, %v308
  %v590 = vadd.f32 %v589, %v314
  %v591 = vadd.f32 %v590, %v320
  %v592 = vadd.f32 %v591, %v326
  %v593 = vadd.f32 %v592, %v332
  %v594 = vadd.f32 %v593, %v338
  %v595 = vadd.f32 %v594, %v344
  %v596 = vadd.f32 %v595, %v350
  %v597 = vadd.f32 %v596, %v356
  %v598 = vadd.f32 %v597, %v362
  %v599 = vadd.f32 %v598, %v368
  %v600 = vadd.f32 %v599, %v374
  %v601 = vadd.f32 %v600, %v380
  %v602 = vadd.f32 %v601, %v386
  %v603 = vadd.f32 %v602, %v392
  %v604 = vadd.f32 %v603, %v398
  %v605 = vadd.f32 %v604, %v404
  %v606 = vadd.f32 %v605, %v410
  %v607 = vadd.f32 %v606, %v416
  %v608 = vadd.f32 %v607, %v422
  %v609 = vadd.f32 %v608, %v428
  %v610 = vadd.f32 %v609, %v434
  %v611 = vadd.f32 %v610, %v440
  %v612 = vadd.f32 %v611, %v446
  %v613 = vadd.f32 %v612, %v452
  %v614 = vadd.f32 %v613, %v458
  %v615 = vadd.f32 %v614, %v464
  %v616 = vadd.f32 %v615, %v470
  %v617 = vadd.f32 %v616, %v476
  %v618 = vadd.f32 %v617, %v482
  %v619 = vadd.f32 %v618, %v488
  %v620 = vadd.f32 %v619, %v494
  %v621 = vadd.f32 %v620, %v500
  %v622 = vadd.f32 %v621, %v506
  %v623 = vadd.f32 %v622, %v512
  %v624 = vadd.f32 %v623, %v518
  %v625 = vadd.f32 %v624, %v524
  %v626 = vadd.f32 %v625, %v530
  %v627 = vadd.f32 %v626, %v536
  %v628 = vadd.f32 %v627, %v542
  %v629 = vadd.f32 %v628, %v548
  %v630 = vadd.f32 %v629, %v554
  %v631 = vadd.f32 %v630, %v560
  %v632 = vadd.f32 %v631, %v566
  %v633 = vadd.f32 %v632, %v572
  %v634 = vadd.f32 %v633, %v578
  %v635 = vadd.f32 %v634, %v584
  %v636 = vrot.slane %v635, 4
  %v637 = vadd.f32 %v635, %v636
  %v638 = vrot.slane %v637, 2
  %v639 = vadd.f32 %v637, %v638
  %v640 = vrot.slane %v639, 1
  %v641 = vadd.f32 %v639, %v640
  %v642 = vadd.f32 %v298, %v304
  %v643 = vadd.f32 %v642, %v310
  %v644 = vadd.f32 %v643, %v316
  %v645 = vadd.f32 %v644, %v322
  %v646 = vadd.f32 %v645, %v328
  %v647 = vadd.f32 %v646, %v334
  %v648 = vadd.f32 %v647, %v340
  %v649 = vadd.f32 %v648, %v346
  %v650 = vadd.f32 %v649, %v352
  %v651 = vadd.f32 %v650, %v358
  %v652 = vadd.f32 %v651, %v364
  %v653 = vadd.f32 %v652, %v370
  %v654 = vadd.f32 %v653, %v376
  %v655 = vadd.f32 %v654, %v382
  %v656 = vadd.f32 %v655, %v388
  %v657 = vadd.f32 %v656, %v394
  %v658 = vadd.f32 %v657, %v400
  %v659 = vadd.f32 %v658, %v406
  %v660 = vadd.f32 %v659, %v412
  %v661 = vadd.f32 %v660, %v418
  %v662 = vadd.f32 %v661, %v424
  %v663 = vadd.f32 %v662, %v430
  %v664 = vadd.f32 %v663, %v436
  %v665 = vadd.f32 %v664, %v442
  %v666 = vadd.f32 %v665, %v448
  %v667 = vadd.f32 %v666, %v454
  %v668 = vadd.f32 %v667, %v460
  %v669 = vadd.f32 %v668, %v466
  %v670 = vadd.f32 %v669, %v472
  %v671 = vadd.f32 %v670, %v478
  %v672 = vadd.f32 %v671, %v484
  %v673 = vadd.f32 %v672, %v490
  %v674 = vadd.f32 %v673, %v496
  %v675 = vadd.f32 %v674, %v502
  %v676 = vadd.f32 %v675, %v508
  %v677 = vadd.f32 %v676, %v514
  %v678 = vadd.f32 %v677, %v520
  %v679 = vadd.f32 %v678, %v526
  %v680 = vadd.f32 %v679, %v532
  %v681 = vadd.f32 %v680, %v538
  %v682 = vadd.f32 %v681, %v544
  %v683 = vadd.f32 %v682, %v550
  %v684 = vadd.f32 %v683, %v556
  %v685 = vadd.f32 %v684, %v562
  %v686 = vadd.f32 %v685, %v568
  %v687 = vadd.f32 %v686, %v574
  %v688 = vadd.f32 %v687, %v580
  %v689 = vadd.f32 %v688, %v586
  %v690 = vrot.slane %v689, 4
  %v691 = vadd.f32 %v689, %v690
  %v692 = vrot.slane %v691, 2
  %v693 = vadd.f32 %v691, %v692
  %v694 = vrot.slane %v693, 1
  %v695 = vadd.f32 %v693, %v694
  %v696 = vmul.f32 %v641, 0.0025510204
  %v697 = vmul.f32 %v695, 0.0025510204
  %v698 = vmul.f32 %v296, %v296
  %v699 = vmul.f32 %v298, %v298
  %v700 = vmul.f32 %v302, %v302
  %v701 = vmul.f32 %v304, %v304
  %v702 = vmul.f32 %v308, %v308
  %v703 = vmul.f32 %v310, %v310
  %v704 = vmul.f32 %v314, %v314
  %v705 = vmul.f32 %v316, %v316
  %v706 = vmul.f32 %v320, %v320
  %v707 = vmul.f32 %v322, %v322
  %v708 = vmul.f32 %v326, %v326
  %v709 = vmul.f32 %v328, %v328
  %v710 = vmul.f32 %v332, %v332
  %v711 = vmul.f32 %v334, %v334
  %v712 = vmul.f32 %v338, %v338
  %v713 = vmul.f32 %v340, %v340
  %v714 = vmul.f32 %v344, %v344
  %v715 = vmul.f32 %v346, %v346
  %v716 = vmul.f32 %v350, %v350
  %v717 = vmul.f32 %v352, %v352
  %v718 = vmul.f32 %v356, %v356
  %v719 = vmul.f32 %v358, %v358
  %v720 = vmul.f32 %v362, %v362
  %v721 = vmul.f32 %v364, %v364
  %v722 = vmul.f32 %v368, %v368
  %v723 = vmul.f32 %v370, %v370
  %v724 = vmul.f32 %v374, %v374
  %v725 = vmul.f32 %v376, %v376
  %v726 = vmul.f32 %v380, %v380
  %v727 = vmul.f32 %v382, %v382
  %v728 = vmul.f32 %v386, %v386
  %v729 = vmul.f32 %v388, %v388
  %v730 = vmul.f32 %v392, %v392
  %v731 = vmul.f32 %v394, %v394
  %v732 = vmul.f32 %v398, %v398
  %v733 = vmul.f32 %v400, %v400
  %v734 = vmul.f32 %v404, %v404
  %v735 = vmul.f32 %v406, %v406
  %v736 = vmul.f32 %v410, %v410
  %v737 = vmul.f32 %v412, %v412
  %v738 = vmul.f32 %v416, %v416
  %v739 = vmul.f32 %v418, %v418
  %v740 = vmul.f32 %v422, %v422
  %v741 = vmul.f32 %v424, %v424
  %v742 = vmul.f32 %v428, %v428
  %v743 = vmul.f32 %v430, %v430
  %v744 = vmul.f32 %v434, %v434
  %v745 = vmul.f32 %v436, %v436
  %v746 = vmul.f32 %v440, %v440
  %v747 = vmul.f32 %v442, %v442
  %v748 = vmul.f32 %v446, %v446
  %v749 = vmul.f32 %v448, %v448
  %v750 = vmul.f32 %v452, %v452
  %v751 = vmul.f32 %v454, %v454
  %v752 = vmul.f32 %v458, %v458
  %v753 = vmul.f32 %v460, %v460
  %v754 = vmul.f32 %v464, %v464
  %v755 = vmul.f32 %v466, %v466
  %v756 = vmul.f32 %v470, %v470
  %v757 = vmul.f32 %v472, %v472
  %v758 = vmul.f32 %v476, %v476
  %v759 = vmul.f32 %v478, %v478
  %v760 = vmul.f32 %v482, %v482
  %v761 = vmul.f32 %v484, %v484
  %v762 = vmul.f32 %v488, %v488
  %v763 = vmul.f32 %v490, %v490
  %v764 = vmul.f32 %v494, %v494
  %v765 = vmul.f32 %v496, %v496
  %v766 = vmul.f32 %v500, %v500
  %v767 = vmul.f32 %v502, %v502
  %v768 = vmul.f32 %v506, %v506
  %v769 = vmul.f32 %v508, %v508
  %v770 = vmul.f32 %v512, %v512
  %v771 = vmul.f32 %v514, %v514
  %v772 = vmul.f32 %v518, %v518
  %v773 = vmul.f32 %v520, %v520
  %v774 = vmul.f32 %v524, %v524
  %v775 = vmul.f32 %v526, %v526
  %v776 = vmul.f32 %v530, %v530
  %v777 = vmul.f32 %v532, %v532
  %v778 = vmul.f32 %v536, %v536
  %v779 = vmul.f32 %v538, %v538
  %v780 = vmul.f32 %v542, %v542
  %v781 = vmul.f32 %v544, %v544
  %v782 = vmul.f32 %v548, %v548
  %v783 = vmul.f32 %v550, %v550
  %v784 = vmul.f32 %v554, %v554
  %v785 = vmul.f32 %v556, %v556
  %v786 = vmul.f32 %v560, %v560
  %v787 = vmul.f32 %v562, %v562
  %v788 = vmul.f32 %v566, %v566
  %v789 = vmul.f32 %v568, %v568
  %v790 = vmul.f32 %v572, %v572
  %v791 = vmul.f32 %v574, %v574
  %v792 = vmul.f32 %v578, %v578
  %v793 = vmul.f32 %v580, %v580
  %v794 = vmul.f32 %v584, %v584
  %v795 = vmul.f32 %v586, %v586
  %v796 = vadd.f32 %v698, %v700
  %v797 = vadd.f32 %v796, %v702
  %v798 = vadd.f32 %v797, %v704
  %v799 = vadd.f32 %v798, %v706
  %v800 = vadd.f32 %v799, %v708
  %v801 = vadd.f32 %v800, %v710
  %v802 = vadd.f32 %v801, %v712
  %v803 = vadd.f32 %v802, %v714
  %v804 = vadd.f32 %v803, %v716
  %v805 = vadd.f32 %v804, %v718
  %v806 = vadd.f32 %v805, %v720
  %v807 = vadd.f32 %v806, %v722
  %v808 = vadd.f32 %v807, %v724
  %v809 = vadd.f32 %v808, %v726
  %v810 = vadd.f32 %v809, %v728
  %v811 = vadd.f32 %v810, %v730
  %v812 = vadd.f32 %v811, %v732
  %v813 = vadd.f32 %v812, %v734
  %v814 = vadd.f32 %v813, %v736
  %v815 = vadd.f32 %v814, %v738
  %v816 = vadd.f32 %v815, %v740
  %v817 = vadd.f32 %v816, %v742
  %v818 = vadd.f32 %v817, %v744
  %v819 = vadd.f32 %v818, %v746
  %v820 = vadd.f32 %v819, %v748
  %v821 = vadd.f32 %v820, %v750
  %v822 = vadd.f32 %v821, %v752
  %v823 = vadd.f32 %v822, %v754
  %v824 = vadd.f32 %v823, %v756
  %v825 = vadd.f32 %v824, %v758
  %v826 = vadd.f32 %v825, %v760
  %v827 = vadd.f32 %v826, %v762
  %v828 = vadd.f32 %v827, %v764
  %v829 = vadd.f32 %v828, %v766
  %v830 = vadd.f32 %v829, %v768
  %v831 = vadd.f32 %v830, %v770
  %v832 = vadd.f32 %v831, %v772
  %v833 = vadd.f32 %v832, %v774
  %v834 = vadd.f32 %v833, %v776
  %v835 = vadd.f32 %v834, %v778
  %v836 = vadd.f32 %v835, %v780
  %v837 = vadd.f32 %v836, %v782
  %v838 = vadd.f32 %v837, %v784
  %v839 = vadd.f32 %v838, %v786
  %v840 = vadd.f32 %v839, %v788
  %v841 = vadd.f32 %v840, %v790
  %v842 = vadd.f32 %v841, %v792
  %v843 = vadd.f32 %v842, %v794
  %v844 = vrot.slane %v843, 4
  %v845 = vadd.f32 %v843, %v844
  %v846 = vrot.slane %v845, 2
  %v847 = vadd.f32 %v845, %v846
  %v848 = vrot.slane %v847, 1
  %v849 = vadd.f32 %v847, %v848
  %v850 = vadd.f32 %v699, %v701
  %v851 = vadd.f32 %v850, %v703
  %v852 = vadd.f32 %v851, %v705
  %v853 = vadd.f32 %v852, %v707
  %v854 = vadd.f32 %v853, %v709
  %v855 = vadd.f32 %v854, %v711
  %v856 = vadd.f32 %v855, %v713
  %v857 = vadd.f32 %v856, %v715
  %v858 = vadd.f32 %v857, %v717
  %v859 = vadd.f32 %v858, %v719
  %v860 = vadd.f32 %v859, %v721
  %v861 = vadd.f32 %v860, %v723
  %v862 = vadd.f32 %v861, %v725
  %v863 = vadd.f32 %v862, %v727
  %v864 = vadd.f32 %v863, %v729
  %v865 = vadd.f32 %v864, %v731
  %v866 = vadd.f32 %v865, %v733
  %v867 = vadd.f32 %v866, %v735
  %v868 = vadd.f32 %v867, %v737
  %v869 = vadd.f32 %v868, %v739
  %v870 = vadd.f32 %v869, %v741
  %v871 = vadd.f32 %v870, %v743
  %v872 = vadd.f32 %v871, %v745
  %v873 = vadd.f32 %v872, %v747
  %v874 = vadd.f32 %v873, %v749
  %v875 = vadd.f32 %v874, %v751
  %v876 = vadd.f32 %v875, %v753
  %v877 = vadd.f32 %v876, %v755
  %v878 = vadd.f32 %v877, %v757
  %v879 = vadd.f32 %v878, %v759
  %v880 = vadd.f32 %v879, %v761
  %v881 = vadd.f32 %v880, %v763
  %v882 = vadd.f32 %v881, %v765
  %v883 = vadd.f32 %v882, %v767
  %v884 = vadd.f32 %v883, %v769
  %v885 = vadd.f32 %v884, %v771
  %v886 = vadd.f32 %v885, %v773
  %v887 = vadd.f32 %v886, %v775
  %v888 = vadd.f32 %v887, %v777
  %v889 = vadd.f32 %v888, %v779
  %v890 = vadd.f32 %v889, %v781
  %v891 = vadd.f32 %v890, %v783
  %v892 = vadd.f32 %v891, %v785
  %v893 = vadd.f32 %v892, %v787
  %v894 = vadd.f32 %v893, %v789
  %v895 = vadd.f32 %v894, %v791
  %v896 = vadd.f32 %v895, %v793
  %v897 = vadd.f32 %v896, %v795
  %v898 = vrot.slane %v897, 4
  %v899 = vadd.f32 %v897, %v898
  %v900 = vrot.slane %v899, 2
  %v901 = vadd.f32 %v899, %v900
  %v902 = vrot.slane %v901, 1
  %v903 = vadd.f32 %v901, %v902
  %v904 = vmul.f32 %v849, 0.0025510204
  %v905 = vmul.f32 %v903, 0.0025510204
  %v906 = vmul.f32 %v696, %v696
  %v907 = vmul.f32 %v697, %v697
  %v908 = vsub.f32 %v904, %v906
  %v909 = vsub.f32 %v905, %v907
  %v910 = vld [vmem:[%s2] sm:$0x3]
  %v911 = vadd.f32 %v908, 1e-05
  %v912 = vadd.f32 %v909, 1e-05
  %v913 = vrsqrt.pop %v911
  %v914 = vrsqrt.pop %v912
  %v917 = vcombine.low %v913, %v914
  %v919 = vunpack.c.l.s4 1966171168
  %v920 = vunpack.c.0.s8 %v919
  %v921 = vlaneseq
  %v922 = vshrl.u32 %v921, 7
  %v923 = vsub.s32 %v920, %v922
  %v924 = vrot.slane %v917, %v923
  %v926 = vunpack.c.l.s4 1966171168
  %v927 = vunpack.c.0.s8 %v926
  %v928 = vlaneseq
  %v929 = vshrl.u32 %v928, 7
  %v930 = vsub.s32 %v927, %v929
  %v931 = vrot.slane %v924, %v930
  %v933 = vmul.f32 %v910, %v931
  %v934 = vadd.f32 %v933, %v933
  %v935 = vld [vmem:[%s3] sm:$0x3]
  %v937 = vlaneseq
  %v938 = vshrl.u32 %v937, 7
  %v939 = vsub.s32 0, %v938
  %v940 = vrot.slane %v933, %v939
  %v941 = vlaneseq
  %v942 = vshrl.u32 %v941, 7
  %v943 = vsub.s32 1, %v942
  %v944 = vrot.slane %v933, %v943
  %v947 = vmul.f32 %v696, %v940
  %v948 = vmul.f32 %v697, %v944
  %v951 = vcombine.low %v947, %v948
  %v953 = vunpack.c.l.s4 1966171168
  %v954 = vunpack.c.0.s8 %v953
  %v955 = vlaneseq
  %v956 = vshrl.u32 %v955, 7
  %v957 = vsub.s32 %v954, %v956
  %v958 = vrot.slane %v951, %v957
  %v960 = vunpack.c.l.s4 1966171168
  %v961 = vunpack.c.0.s8 %v960
  %v962 = vlaneseq
  %v963 = vshrl.u32 %v962, 7
  %v964 = vsub.s32 %v961, %v963
  %v965 = vrot.slane %v958, %v964
  %v967 = vsub.f32 %v935, %v965
  %v968 = vmul.f32 %v967, 2.0
  %v970 = vlaneseq
  %v971 = vshrl.u32 %v970, 7
  %v972 = vsub.s32 0, %v971
  %v973 = vrot.slane %v934, %v972
  %v974 = vlaneseq
  %v975 = vshrl.u32 %v974, 7
  %v976 = vsub.s32 1, %v975
  %v977 = vrot.slane %v934, %v976
  %v980 = vmul.f32 %v296, %v973
  %v981 = vmul.f32 %v298, %v977
  %v982 = vmul.f32 %v302, %v973
  %v983 = vmul.f32 %v304, %v977
  %v984 = vmul.f32 %v308, %v973
  %v985 = vmul.f32 %v310, %v977
  %v986 = vmul.f32 %v314, %v973
  %v987 = vmul.f32 %v316, %v977
  %v988 = vmul.f32 %v320, %v973
  %v989 = vmul.f32 %v322, %v977
  %v990 = vmul.f32 %v326, %v973
  %v991 = vmul.f32 %v328, %v977
  %v992 = vmul.f32 %v332, %v973
  %v993 = vmul.f32 %v334, %v977
  %v994 = vmul.f32 %v338, %v973
  %v995 = vmul.f32 %v340, %v977
  %v996 = vmul.f32 %v344, %v973
  %v997 = vmul.f32 %v346, %v977
  %v998 = vmul.f32 %v350, %v973
  %v999 = vmul.f32 %v352, %v977
  %v1000 = vmul.f32 %v356, %v973
  %v1001 = vmul.f32 %v358, %v977
  %v1002 = vmul.f32 %v362, %v973
  %v1003 = vmul.f32 %v364, %v977
  %v1004 = vmul.f32 %v368, %v973
  %v1005 = vmul.f32 %v370, %v977
  %v1006 = vmul.f32 %v374, %v973
  %v1007 = vmul.f32 %v376, %v977
  %v1008 = vmul.f32 %v380, %v973
  %v1009 = vmul.f32 %v382, %v977
  %v1010 = vmul.f32 %v386, %v973
  %v1011 = vmul.f32 %v388, %v977
  %v1012 = vmul.f32 %v392, %v973
  %v1013 = vmul.f32 %v394, %v977
  %v1014 = vmul.f32 %v398, %v973
  %v1015 = vmul.f32 %v400, %v977
  %v1016 = vmul.f32 %v404, %v973
  %v1017 = vmul.f32 %v406, %v977
  %v1018 = vmul.f32 %v410, %v973
  %v1019 = vmul.f32 %v412, %v977
  %v1020 = vmul.f32 %v416, %v973
  %v1021 = vmul.f32 %v418, %v977
  %v1022 = vmul.f32 %v422, %v973
  %v1023 = vmul.f32 %v424, %v977
  %v1024 = vmul.f32 %v428, %v973
  %v1025 = vmul.f32 %v430, %v977
  %v1026 = vmul.f32 %v434, %v973
  %v1027 = vmul.f32 %v436, %v977
  %v1028 = vmul.f32 %v440, %v973
  %v1029 = vmul.f32 %v442, %v977
  %v1030 = vmul.f32 %v446, %v973
  %v1031 = vmul.f32 %v448, %v977
  %v1032 = vmul.f32 %v452, %v973
  %v1033 = vmul.f32 %v454, %v977
  %v1034 = vmul.f32 %v458, %v973
  %v1035 = vmul.f32 %v460, %v977
  %v1036 = vmul.f32 %v464, %v973
  %v1037 = vmul.f32 %v466, %v977
  %v1038 = vmul.f32 %v470, %v973
  %v1039 = vmul.f32 %v472, %v977
  %v1040 = vmul.f32 %v476, %v973
  %v1041 = vmul.f32 %v478, %v977
  %v1042 = vmul.f32 %v482, %v973
  %v1043 = vmul.f32 %v484, %v977
  %v1044 = vmul.f32 %v488, %v973
  %v1045 = vmul.f32 %v490, %v977
  %v1046 = vmul.f32 %v494, %v973
  %v1047 = vmul.f32 %v496, %v977
  %v1048 = vmul.f32 %v500, %v973
  %v1049 = vmul.f32 %v502, %v977
  %v1050 = vmul.f32 %v506, %v973
  %v1051 = vmul.f32 %v508, %v977
  %v1052 = vmul.f32 %v512, %v973
  %v1053 = vmul.f32 %v514, %v977
  %v1054 = vmul.f32 %v518, %v973
  %v1055 = vmul.f32 %v520, %v977
  %v1056 = vmul.f32 %v524, %v973
  %v1057 = vmul.f32 %v526, %v977
  %v1058 = vmul.f32 %v530, %v973
  %v1059 = vmul.f32 %v532, %v977
  %v1060 = vmul.f32 %v536, %v973
  %v1061 = vmul.f32 %v538, %v977
  %v1062 = vmul.f32 %v542, %v973
  %v1063 = vmul.f32 %v544, %v977
  %v1064 = vmul.f32 %v548, %v973
  %v1065 = vmul.f32 %v550, %v977
  %v1066 = vmul.f32 %v554, %v973
  %v1067 = vmul.f32 %v556, %v977
  %v1068 = vmul.f32 %v560, %v973
  %v1069 = vmul.f32 %v562, %v977
  %v1070 = vmul.f32 %v566, %v973
  %v1071 = vmul.f32 %v568, %v977
  %v1072 = vmul.f32 %v572, %v973
  %v1073 = vmul.f32 %v574, %v977
  %v1074 = vmul.f32 %v578, %v973
  %v1075 = vmul.f32 %v580, %v977
  %v1076 = vmul.f32 %v584, %v973
  %v1077 = vmul.f32 %v586, %v977
  %v1079 = vlaneseq
  %v1080 = vshrl.u32 %v1079, 7
  %v1081 = vsub.s32 0, %v1080
  %v1082 = vrot.slane %v968, %v1081
  %v1083 = vlaneseq
  %v1084 = vshrl.u32 %v1083, 7
  %v1085 = vsub.s32 1, %v1084
  %v1086 = vrot.slane %v968, %v1085
  %v1089 = vadd.f32 %v980, %v1082
  %v1090 = vadd.f32 %v981, %v1086
  %v1091 = vadd.f32 %v982, %v1082
  %v1092 = vadd.f32 %v983, %v1086
  %v1093 = vadd.f32 %v984, %v1082
  %v1094 = vadd.f32 %v985, %v1086
  %v1095 = vadd.f32 %v986, %v1082
  %v1096 = vadd.f32 %v987, %v1086
  %v1097 = vadd.f32 %v988, %v1082
  %v1098 = vadd.f32 %v989, %v1086
  %v1099 = vadd.f32 %v990, %v1082
  %v1100 = vadd.f32 %v991, %v1086
  %v1101 = vadd.f32 %v992, %v1082
  %v1102 = vadd.f32 %v993, %v1086
  %v1103 = vadd.f32 %v994, %v1082
  %v1104 = vadd.f32 %v995, %v1086
  %v1105 = vadd.f32 %v996, %v1082
  %v1106 = vadd.f32 %v997, %v1086
  %v1107 = vadd.f32 %v998, %v1082
  %v1108 = vadd.f32 %v999, %v1086
  %v1109 = vadd.f32 %v1000, %v1082
  %v1110 = vadd.f32 %v1001, %v1086
  %v1111 = vadd.f32 %v1002, %v1082
  %v1112 = vadd.f32 %v1003, %v1086
  %v1113 = vadd.f32 %v1004, %v1082
  %v1114 = vadd.f32 %v1005, %v1086
  %v1115 = vadd.f32 %v1006, %v1082
  %v1116 = vadd.f32 %v1007, %v1086
  %v1117 = vadd.f32 %v1008, %v1082
  %v1118 = vadd.f32 %v1009, %v1086
  %v1119 = vadd.f32 %v1010, %v1082
  %v1120 = vadd.f32 %v1011, %v1086
  %v1121 = vadd.f32 %v1012, %v1082
  %v1122 = vadd.f32 %v1013, %v1086
  %v1123 = vadd.f32 %v1014, %v1082
  %v1124 = vadd.f32 %v1015, %v1086
  %v1125 = vadd.f32 %v1016, %v1082
  %v1126 = vadd.f32 %v1017, %v1086
  %v1127 = vadd.f32 %v1018, %v1082
  %v1128 = vadd.f32 %v1019, %v1086
  %v1129 = vadd.f32 %v1020, %v1082
  %v1130 = vadd.f32 %v1021, %v1086
  %v1131 = vadd.f32 %v1022, %v1082
  %v1132 = vadd.f32 %v1023, %v1086
  %v1133 = vadd.f32 %v1024, %v1082
  %v1134 = vadd.f32 %v1025, %v1086
  %v1135 = vadd.f32 %v1026, %v1082
  %v1136 = vadd.f32 %v1027, %v1086
  %v1137 = vadd.f32 %v1028, %v1082
  %v1138 = vadd.f32 %v1029, %v1086
  %v1139 = vadd.f32 %v1030, %v1082
  %v1140 = vadd.f32 %v1031, %v1086
  %v1141 = vadd.f32 %v1032, %v1082
  %v1142 = vadd.f32 %v1033, %v1086
  %v1143 = vadd.f32 %v1034, %v1082
  %v1144 = vadd.f32 %v1035, %v1086
  %v1145 = vadd.f32 %v1036, %v1082
  %v1146 = vadd.f32 %v1037, %v1086
  %v1147 = vadd.f32 %v1038, %v1082
  %v1148 = vadd.f32 %v1039, %v1086
  %v1149 = vadd.f32 %v1040, %v1082
  %v1150 = vadd.f32 %v1041, %v1086
  %v1151 = vadd.f32 %v1042, %v1082
  %v1152 = vadd.f32 %v1043, %v1086
  %v1153 = vadd.f32 %v1044, %v1082
  %v1154 = vadd.f32 %v1045, %v1086
  %v1155 = vadd.f32 %v1046, %v1082
  %v1156 = vadd.f32 %v1047, %v1086
  %v1157 = vadd.f32 %v1048, %v1082
  %v1158 = vadd.f32 %v1049, %v1086
  %v1159 = vadd.f32 %v1050, %v1082
  %v1160 = vadd.f32 %v1051, %v1086
  %v1161 = vadd.f32 %v1052, %v1082
  %v1162 = vadd.f32 %v1053, %v1086
  %v1163 = vadd.f32 %v1054, %v1082
  %v1164 = vadd.f32 %v1055, %v1086
  %v1165 = vadd.f32 %v1056, %v1082
  %v1166 = vadd.f32 %v1057, %v1086
  %v1167 = vadd.f32 %v1058, %v1082
  %v1168 = vadd.f32 %v1059, %v1086
  %v1169 = vadd.f32 %v1060, %v1082
  %v1170 = vadd.f32 %v1061, %v1086
  %v1171 = vadd.f32 %v1062, %v1082
  %v1172 = vadd.f32 %v1063, %v1086
  %v1173 = vadd.f32 %v1064, %v1082
  %v1174 = vadd.f32 %v1065, %v1086
  %v1175 = vadd.f32 %v1066, %v1082
  %v1176 = vadd.f32 %v1067, %v1086
  %v1177 = vadd.f32 %v1068, %v1082
  %v1178 = vadd.f32 %v1069, %v1086
  %v1179 = vadd.f32 %v1070, %v1082
  %v1180 = vadd.f32 %v1071, %v1086
  %v1181 = vadd.f32 %v1072, %v1082
  %v1182 = vadd.f32 %v1073, %v1086
  %v1183 = vadd.f32 %v1074, %v1082
  %v1184 = vadd.f32 %v1075, %v1086
  %v1185 = vadd.f32 %v1076, %v1082
  %v1186 = vadd.f32 %v1077, %v1086
  %1187 = vst [vmem:[%s4] sm:$0xff] %v1089
  %1188 = vst [vmem:[%s4 + $0x8] sm:$0xff] %v1090
  %1189 = vst [vmem:[%s4 + $0x10] sm:$0xff] %v1091
  %1190 = vst [vmem:[%s4 + $0x18] sm:$0xff] %v1092
  %1191 = vst [vmem:[%s4 + $0x20] sm:$0xff] %v1093
  %1192 = vst [vmem:[%s4 + $0x28] sm:$0xff] %v1094
  %1193 = vst [vmem:[%s4 + $0x30] sm:$0xff] %v1095
  %1194 = vst [vmem:[%s4 + $0x38] sm:$0xff] %v1096
  %1195 = vst [vmem:[%s4 + $0x40] sm:$0xff] %v1097
  %1196 = vst [vmem:[%s4 + $0x48] sm:$0xff] %v1098
  %1197 = vst [vmem:[%s4 + $0x50] sm:$0xff] %v1099
  %1198 = vst [vmem:[%s4 + $0x58] sm:$0xff] %v1100
  %1199 = vst [vmem:[%s4 + $0x60] sm:$0xff] %v1101
  %1200 = vst [vmem:[%s4 + $0x68] sm:$0xff] %v1102
  %1201 = vst [vmem:[%s4 + $0x70] sm:$0xff] %v1103
  %1202 = vst [vmem:[%s4 + $0x78] sm:$0xff] %v1104
  %1203 = vst [vmem:[%s4 + $0x80] sm:$0xff] %v1105
  %1204 = vst [vmem:[%s4 + $0x88] sm:$0xff] %v1106
  %1205 = vst [vmem:[%s4 + $0x90] sm:$0xff] %v1107
  %1206 = vst [vmem:[%s4 + $0x98] sm:$0xff] %v1108
  %1207 = vst [vmem:[%s4 + $0xa0] sm:$0xff] %v1109
  %1208 = vst [vmem:[%s4 + $0xa8] sm:$0xff] %v1110
  %1209 = vst [vmem:[%s4 + $0xb0] sm:$0xff] %v1111
  %1210 = vst [vmem:[%s4 + $0xb8] sm:$0xff] %v1112
  %1211 = vst [vmem:[%s4 + $0xc0] sm:$0xff] %v1113
  %1212 = vst [vmem:[%s4 + $0xc8] sm:$0xff] %v1114
  %1213 = vst [vmem:[%s4 + $0xd0] sm:$0xff] %v1115
  %1214 = vst [vmem:[%s4 + $0xd8] sm:$0xff] %v1116
  %1215 = vst [vmem:[%s4 + $0xe0] sm:$0xff] %v1117
  %1216 = vst [vmem:[%s4 + $0xe8] sm:$0xff] %v1118
  %1217 = vst [vmem:[%s4 + $0xf0] sm:$0xff] %v1119
  %1218 = vst [vmem:[%s4 + $0xf8] sm:$0xff] %v1120
  %1219 = vst [vmem:[%s4 + $0x100] sm:$0xff] %v1121
  %1220 = vst [vmem:[%s4 + $0x108] sm:$0xff] %v1122
  %1221 = vst [vmem:[%s4 + $0x110] sm:$0xff] %v1123
  %1222 = vst [vmem:[%s4 + $0x118] sm:$0xff] %v1124
  %1223 = vst [vmem:[%s4 + $0x120] sm:$0xff] %v1125
  %1224 = vst [vmem:[%s4 + $0x128] sm:$0xff] %v1126
  %1225 = vst [vmem:[%s4 + $0x130] sm:$0xff] %v1127
  %1226 = vst [vmem:[%s4 + $0x138] sm:$0xff] %v1128
  %1227 = vst [vmem:[%s4 + $0x140] sm:$0xff] %v1129
  %1228 = vst [vmem:[%s4 + $0x148] sm:$0xff] %v1130
  %1229 = vst [vmem:[%s4 + $0x150] sm:$0xff] %v1131
  %1230 = vst [vmem:[%s4 + $0x158] sm:$0xff] %v1132
  %1231 = vst [vmem:[%s4 + $0x160] sm:$0xff] %v1133
  %1232 = vst [vmem:[%s4 + $0x168] sm:$0xff] %v1134
  %1233 = vst [vmem:[%s4 + $0x170] sm:$0xff] %v1135
  %1234 = vst [vmem:[%s4 + $0x178] sm:$0xff] %v1136
  %1235 = vst [vmem:[%s4 + $0x180] sm:$0xff] %v1137
  %1236 = vst [vmem:[%s4 + $0x188] sm:$0xff] %v1138
  %1237 = vst [vmem:[%s4 + $0x190] sm:$0xff] %v1139
  %1238 = vst [vmem:[%s4 + $0x198] sm:$0xff] %v1140
  %1239 = vst [vmem:[%s4 + $0x1a0] sm:$0xff] %v1141
  %1240 = vst [vmem:[%s4 + $0x1a8] sm:$0xff] %v1142
  %1241 = vst [vmem:[%s4 + $0x1b0] sm:$0xff] %v1143
  %1242 = vst [vmem:[%s4 + $0x1b8] sm:$0xff] %v1144
  %1243 = vst [vmem:[%s4 + $0x1c0] sm:$0xff] %v1145
  %1244 = vst [vmem:[%s4 + $0x1c8] sm:$0xff] %v1146
  %1245 = vst [vmem:[%s4 + $0x1d0] sm:$0xff] %v1147
  %1246 = vst [vmem:[%s4 + $0x1d8] sm:$0xff] %v1148
  %1247 = vst [vmem:[%s4 + $0x1e0] sm:$0xff] %v1149
  %1248 = vst [vmem:[%s4 + $0x1e8] sm:$0xff] %v1150
  %1249 = vst [vmem:[%s4 + $0x1f0] sm:$0xff] %v1151
  %1250 = vst [vmem:[%s4 + $0x1f8] sm:$0xff] %v1152
  %1251 = vst [vmem:[%s4 + $0x200] sm:$0xff] %v1153
  %1252 = vst [vmem:[%s4 + $0x208] sm:$0xff] %v1154
  %1253 = vst [vmem:[%s4 + $0x210] sm:$0xff] %v1155
  %1254 = vst [vmem:[%s4 + $0x218] sm:$0xff] %v1156
  %1255 = vst [vmem:[%s4 + $0x220] sm:$0xff] %v1157
  %1256 = vst [vmem:[%s4 + $0x228] sm:$0xff] %v1158
  %1257 = vst [vmem:[%s4 + $0x230] sm:$0xff] %v1159
  %1258 = vst [vmem:[%s4 + $0x238] sm:$0xff] %v1160
  %1259 = vst [vmem:[%s4 + $0x240] sm:$0xff] %v1161
  %1260 = vst [vmem:[%s4 + $0x248] sm:$0xff] %v1162
  %1261 = vst [vmem:[%s4 + $0x250] sm:$0xff] %v1163
  %1262 = vst [vmem:[%s4 + $0x258] sm:$0xff] %v1164
  %1263 = vst [vmem:[%s4 + $0x260] sm:$0xff] %v1165
  %1264 = vst [vmem:[%s4 + $0x268] sm:$0xff] %v1166
  %1265 = vst [vmem:[%s4 + $0x270] sm:$0xff] %v1167
  %1266 = vst [vmem:[%s4 + $0x278] sm:$0xff] %v1168
  %1267 = vst [vmem:[%s4 + $0x280] sm:$0xff] %v1169
  %1268 = vst [vmem:[%s4 + $0x288] sm:$0xff] %v1170
  %1269 = vst [vmem:[%s4 + $0x290] sm:$0xff] %v1171
  %1270 = vst [vmem:[%s4 + $0x298] sm:$0xff] %v1172
  %1271 = vst [vmem:[%s4 + $0x2a0] sm:$0xff] %v1173
  %1272 = vst [vmem:[%s4 + $0x2a8] sm:$0xff] %v1174
  %1273 = vst [vmem:[%s4 + $0x2b0] sm:$0xff] %v1175
  %1274 = vst [vmem:[%s4 + $0x2b8] sm:$0xff] %v1176
  %1275 = vst [vmem:[%s4 + $0x2c0] sm:$0xff] %v1177
  %1276 = vst [vmem:[%s4 + $0x2c8] sm:$0xff] %v1178
  %1277 = vst [vmem:[%s4 + $0x2d0] sm:$0xff] %v1179
  %1278 = vst [vmem:[%s4 + $0x2d8] sm:$0xff] %v1180
  %1279 = vst [vmem:[%s4 + $0x2e0] sm:$0xff] %v1181
  %1280 = vst [vmem:[%s4 + $0x2e8] sm:$0xff] %v1182
  %1281 = vst [vmem:[%s4 + $0x2f0] sm:$0xff] %v1183
  %1282 = vst [vmem:[%s4 + $0x2f8] sm:$0xff] %v1184
  %1283 = vst [vmem:[%s4 + $0x300] sm:$0xff] %v1185
  %1284 = vst [vmem:[%s4 + $0x308] sm:$0xff] %v1186
  // Predicated region
  $region18: #{model_forward.1} parent=0 // pred_check
    _
  $region19: #{model_forward.1} parent=0 // pred_check_branch
    %1286 = sbr.rel (0) target = $region21
  $region20: #{model_forward.1} parent=0 // pred_region
    _
  $region21: #{model_forward.1} parent=0 // pred_fallthru
    _
  // Predicated region
  $region22: #{model_forward.1} parent=0 // pred_check
    _
  $region23: #{model_forward.1} parent=0 // pred_check_branch
    %1288 = sbr.rel (0) target = $region25
  $region24: #{model_forward.1} parent=0 // pred_region
    _
  $region25: #{model_forward.1} parent=0 // pred_fallthru
    _

</llo_original>
